<compile_context>
chip_gen: v5e
topology: v5e:2x2
jax: 0.10.0
libtpu: 0.0.40
codegen_flags: <defaults>
</compile_context>

<pallas_src>
import functools

import jax
import jax.numpy as jnp
from jax.experimental import pallas as pl
from jax.experimental.pallas import tpu as pltpu

WP_DIM = 32
HIDDEN = 64
GEO_DIM = 6                      # xyz + ray direction (latent folded into bias)
D_IN = GEO_DIM + WP_DIM          # full first-layer fan-in (matches reference MLP)


# ---------------------------------------------------------------------------
# Small helpers
# ---------------------------------------------------------------------------
def _round_up(x, m):
    return ((x + m - 1) // m) * m


def _pick_tile(total, max_tile, multiple=128, min_steps=1):
    """Largest lane tile (multiple of `multiple`) <= max_tile, trying to keep
    at least `min_steps` grid steps so both v7x TensorCores get work."""
    total_p = _round_up(max(total, 1), multiple)
    tile = min(_round_up(max_tile, multiple), total_p)
    if min_steps > 1 and total_p // multiple >= min_steps:
        tile = min(tile, _round_up(-(-total_p // min_steps), multiple))
    return tile


def _const_spec(arr):
    nd = arr.ndim
    return pl.BlockSpec(arr.shape, lambda *_, _nd=nd: (0,) * _nd)


# ---------------------------------------------------------------------------
# Pallas kernel 1: per-point MLP (feature-major, fused sigma/rgb head)
# ---------------------------------------------------------------------------
def _mlp_kernel(x_ref, b1_ref, w1_ref, w2_ref, b2_ref, wh_ref, bh_ref, out_ref):
    # Feature-major: x (8, tile), hidden activations (64, tile), output (4, tile).
    # MXU operands in bf16, f32 accumulation; elementwise kept in f32.
    x = x_ref[...].astype(jnp.bfloat16)
    h = jnp.dot(w1_ref[...].astype(jnp.bfloat16), x,
                preferred_element_type=jnp.float32) + b1_ref[...]
    h = jnp.maximum(h, 0.0)
    h = jnp.dot(w2_ref[...].astype(jnp.bfloat16), h.astype(jnp.bfloat16),
                preferred_element_type=jnp.float32) + b2_ref[...]
    h = jnp.maximum(h, 0.0)
    o = jnp.dot(wh_ref[...].astype(jnp.bfloat16), h.astype(jnp.bfloat16),
                preferred_element_type=jnp.float32) + bh_ref[...]
    row = jax.lax.broadcasted_iota(jnp.int32, o.shape, 0)
    # row 0 -> raw sigma, rows 1..3 -> sigmoid(rgb); single lane-dense store.
    out_ref[...] = jnp.where(row == 0, o, jax.nn.sigmoid(o))


def mlp_sigma_rgb(x_t, wp, params, *, max_tile_m=1024):
    """x_t: (N, 6, P) feature-major points+dirs.  Returns (N, 4, P)."""
    N, d, P = x_t.shape
    w1, b1, w2, b2, ws, bs, wr, br = params
    hidden = w1.shape[1]

    # Fold the per-batch latent wp through the latent rows of w1 -> per-batch
    # bias (N, hidden, 1).  NOTE: assumes w1 row order is [geo(6), latent(32)].
    b1_eff = (wp.astype(jnp.float32) @ w1[d:, :] + b1).reshape(N, hidden, 1)

    # Pad the geometric fan-in 6 -> 8 (full sublane group / aligned MXU K).
    d_pad = _round_up(d, 8)
    w1_geo = w1[:d, :]
    if d_pad != d:
        x_t = jnp.pad(x_t, ((0, 0), (0, d_pad - d), (0, 0)))
        w1_geo = jnp.pad(w1_geo, ((0, d_pad - d), (0, 0)))
    w1_geo_t = w1_geo.T                                     # (hidden, 8)
    w2_t = w2.T                                             # (hidden, hidden)
    w_head_t = jnp.concatenate([ws, wr], axis=1).T          # (4, hidden)
    b2_t = b2.reshape(hidden, 1)
    b_head_t = jnp.concatenate([bs, br], axis=1).reshape(4, 1)

    min_steps = max(1, -(-2 // N))          # keep grid product >= 2 (v7x 2 TCs)
    tile = _pick_tile(P, max_tile_m, 128, min_steps)
    p_pad = _round_up(P, tile)
    if p_pad != P:
        x_t = jnp.pad(x_t, ((0, 0), (0, 0), (0, p_pad - P)))

    out = pl.pallas_call(
        _mlp_kernel,
        out_shape=jax.ShapeDtypeStruct((N, 4, p_pad), jnp.float32),
        grid_spec=pltpu.PrefetchScalarGridSpec(
            num_scalar_prefetch=0,
            grid=(N, p_pad // tile),
            in_specs=[
                pl.BlockSpec((None, d_pad, tile), lambda n, i: (n, 0, i)),
                pl.BlockSpec((None, hidden, 1), lambda n, i: (n, 0, 0)),
                _const_spec(w1_geo_t), _const_spec(w2_t), _const_spec(b2_t),
                _const_spec(w_head_t), _const_spec(b_head_t),
            ],
            out_specs=pl.BlockSpec((None, 4, tile), lambda n, i: (n, 0, i)),
        ),
        compiler_params=pltpu.CompilerParams(
            dimension_semantics=("parallel", "parallel")),
    )(x_t, b1_eff, w1_geo_t, w2_t, b2_t, w_head_t, b_head_t)
    return out[:, :, :P]


# ---------------------------------------------------------------------------
# Pallas kernel 2: volume rendering integrator (lane-dense: K sublanes, rays lanes)
# ---------------------------------------------------------------------------
def _integrator_kernel(packed_ref, comp_ref, w_ref, *, last_delta):
    p = packed_ref[...]                          # (5, K, tile): [sigma,r,g,b,z]
    K = p.shape[1]
    sigma = jax.nn.softplus(p[0])                # (K, tile) density
    z = p[4]                                     # (K, tile) depths

    # In-kernel (K, K) constants (no const-input DMAs).
    rk = jax.lax.broadcasted_iota(jnp.int32, (K, K), 0)
    ck = jax.lax.broadcasted_iota(jnp.int32, (K, K), 1)
    d_mat = ((ck == rk + 1).astype(jnp.float32)
             - (ck == rk).astype(jnp.float32))   # row k -> z[k+1] - z[k]
    t_mat = (ck < rk).astype(jnp.float32)        # strictly lower triangular

    row = jax.lax.broadcasted_iota(jnp.int32, z.shape, 0)
    deltas = jnp.dot(d_mat, z, preferred_element_type=jnp.float32)
    deltas = jnp.where(row == K - 1, last_delta, deltas)

    # Clamp tau so sigma * 1e10 never becomes inf (0*inf -> NaN in the cumsum
    # matmul); exp(-80) ~ 0 in f32 so the result is unchanged.
    tau = jnp.minimum(sigma * deltas, 80.0)
    alpha = 1.0 - jnp.exp(-tau)
    # Exclusive cumsum over K (sublanes): trans_k = exp(-sum_{j<k} tau_j)
    #   == prod_{j<k} (1 - alpha_j).
    # TODO(synk): mathematically equal but not bit-identical to the reference
    # cumprod(1 - alpha + 1e-10).
    trans = jnp.exp(-jnp.dot(t_mat, tau, preferred_element_type=jnp.float32))
    weights = alpha * trans                      # (K, tile)
    w_ref[...] = weights

    # Fused lane-dense composite: rows [r, g, b, depth] = sum_K weights * vals.
    comp_ref[...] = jnp.sum(p[1:5] * weights[None], axis=1)     # (4, tile)


def integrator(rgbs, sigmas, zs, *, last_delta=1e10, max_tile_r=2048):
    """rgbs (N,R,K,3), sigmas (N,R,K,1), zs (N,R,K,1)."""
    N, R, K, _ = rgbs.shape
    NR = N * R
    # Lane-dense pack (channels, K, rays).  These transposes are the layout
    # plumbing the kernel needs anyway; the channel concat rides along with
    # them instead of a separate stack round-trip.
    sig_t = sigmas.reshape(NR, K).astype(jnp.float32).T[None]              # (1,K,NR)
    rgb_t = rgbs.reshape(NR, K, 3).astype(jnp.float32).transpose(2, 1, 0)  # (3,K,NR)
    z_t = zs.reshape(NR, K).astype(jnp.float32).T[None]                    # (1,K,NR)
    packed = jnp.concatenate([sig_t, rgb_t, z_t], axis=0)                  # (5,K,NR)

    tile_r = _pick_tile(NR, max_tile_r, 128, min_steps=2)
    r_pad = _round_up(NR, tile_r)
    if r_pad != NR:
        packed = jnp.pad(packed, ((0, 0), (0, 0), (0, r_pad - NR)))

    kern = functools.partial(_integrator_kernel, last_delta=last_delta)
    comp, weights = pl.pallas_call(
        kern,
        out_shape=(jax.ShapeDtypeStruct((4, r_pad), jnp.float32),
                   jax.ShapeDtypeStruct((K, r_pad), jnp.float32)),
        grid_spec=pltpu.PrefetchScalarGridSpec(
            num_scalar_prefetch=0,
            grid=(r_pad // tile_r,),
            in_specs=[pl.BlockSpec((5, K, tile_r), lambda i: (0, 0, i))],
            out_specs=(pl.BlockSpec((4, tile_r), lambda i: (0, i)),
                       pl.BlockSpec((K, tile_r), lambda i: (0, i))),
        ),
        compiler_params=pltpu.CompilerParams(dimension_semantics=("parallel",)),
    )(packed)

    comp = comp[:, :NR]                          # (4, NR)
    weights = weights[:, :NR]                    # (K, NR)
    return dict(
        composite_rgb=comp[:3].T.reshape(N, R, 3),
        composite_depth=comp[3:4].T.reshape(N, R, 1),
        weights=weights.T.reshape(N, R, K, 1),
    )


# ---------------------------------------------------------------------------
# Plain-JAX glue: point sampler, importance sampling, sample unification
# ---------------------------------------------------------------------------
def point_sampler(batch_size, image_size, num_points, ray_start, ray_end, fov_deg):
    H = W = image_size
    focal = 0.5 / jnp.tan(0.5 * jnp.deg2rad(fov_deg))
    xs = (jnp.arange(W, dtype=jnp.float32) + 0.5) / W - 0.5
    ys = (jnp.arange(H, dtype=jnp.float32) + 0.5) / H - 0.5
    yy, xx = jnp.meshgrid(ys, xs, indexing="ij")
    dirs = jnp.stack([xx / focal, yy / focal, jnp.ones_like(xx)], axis=-1)
    dirs = dirs / jnp.linalg.norm(dirs, axis=-1, keepdims=True)
    dirs = jnp.broadcast_to(dirs[None], (batch_size, H, W, 3))
    origins = jnp.zeros((batch_size, H, W, 3), jnp.float32)
    t = jnp.linspace(ray_start, ray_end, num_points, dtype=jnp.float32)
    radii = jnp.broadcast_to(t[None, None, None, :, None],
                             (batch_size, H, W, num_points, 1))
    points = origins[..., None, :] + radii * dirs[..., None, :]
    return dict(points_world=points, rays_world=dirs, ray_origins_world=origins,
                radii=radii, camera_polar=None, camera_azimuthal=None)


def sample_pdf(key, bins, weights, n_importance, eps=1e-5):
    n_rays, n_samples = weights.shape
    weights = weights + eps
    pdf = weights / jnp.sum(weights, -1, keepdims=True)
    cdf = jnp.cumsum(pdf, -1)
    cdf = jnp.concatenate([jnp.zeros_like(cdf[:, :1]), cdf], -1)
    u = jax.random.uniform(key, (n_rays, n_importance), dtype=jnp.float32)
    # TODO(synk): searchsorted/gather is data-dependent; kept in plain JAX.
    inds = jax.vmap(lambda c, uu: jnp.searchsorted(c, uu))(cdf, u)
    below = jnp.clip(inds - 1, 0, n_samples)
    above = jnp.clip(inds, 0, n_samples)
    cdf_below = jnp.take_along_axis(cdf, below, 1)
    cdf_above = jnp.take_along_axis(cdf, above, 1)
    bins_below = jnp.take_along_axis(bins, below, 1)
    bins_above = jnp.take_along_axis(bins, above, 1)
    denom = cdf_above - cdf_below
    denom = jnp.where(denom < eps, 1.0, denom)
    return bins_below + (u - cdf_below) / denom * (bins_above - bins_below)


def sample_importance(key, z_vals, weights, n_importance, smooth_weights=True):
    N, R, K, _ = z_vals.shape
    z = z_vals.reshape(N * R, K)
    w = weights.reshape(N * R, -1) + 1e-5
    if smooth_weights:
        wpad = jnp.pad(w, ((0, 0), (1, 1)), constant_values=-jnp.inf)
        mx = jnp.maximum(wpad[:, :-1], wpad[:, 1:])    # max_pool1d(k=2, s=1, p=1)
        w = 0.5 * (mx[:, :-1] + mx[:, 1:])             # avg_pool1d(k=2, s=1)
        w = w + 0.01
    z_mid = 0.5 * (z[:, :-1] + z[:, 1:])
    samples = sample_pdf(key, z_mid, w[:, 1:-1], n_importance)
    return samples.reshape(N, R, n_importance, 1)


def unify_samples(d1, r1, s1, d2, r2, s2):
    # TODO(synk): sort/gather is data-dependent; kept in plain JAX.
    all_d = jnp.concatenate([d1, d2], axis=-2)
    all_r = jnp.concatenate([r1, r2], axis=-2)
    all_s = jnp.concatenate([s1, s2], axis=-2)
    idx = jnp.argsort(all_d, axis=-2)
    all_d = jnp.take_along_axis(all_d, idx, axis=-2)
    all_r = jnp.take_along_axis(all_r, jnp.broadcast_to(idx, all_r.shape), axis=-2)
    all_s = jnp.take_along_axis(all_s, idx, axis=-2)
    return all_d, all_r, all_s


def get_sigma_rgb(wp, points, ray_dirs, params):
    N, R, K, _ = points.shape
    dirs = jnp.broadcast_to(ray_dirs[:, :, None, :], (N, R, K, 3))
    x = jnp.concatenate([points, dirs], axis=-1).reshape(N, R * K, GEO_DIM)
    x_t = x.astype(jnp.float32).transpose(0, 2, 1)        # (N, 6, R*K) feature-major
    out = mlp_sigma_rgb(x_t, wp, params)                  # (N, 4, R*K)
    out = out.transpose(0, 2, 1).reshape(N, R, K, 4)
    sigma = out[..., :1]
    rgb = out[..., 1:]
    return sigma, rgb


def renderer_forward(wp, params, rendering_options, key):
    N = wp.shape[0]
    res = rendering_options["resolution"]
    K = rendering_options["depth_resolution"]
    sp = point_sampler(N, res, K,
                       rendering_options["ray_start"], rendering_options["ray_end"],
                       rendering_options.get("fov", 30.0))
    R = res * res
    points = sp["points_world"].reshape(N, R, K, 3)
    ray_dirs = sp["rays_world"].reshape(N, R, 3)
    ray_origins = sp["ray_origins_world"].reshape(N, R, 3)
    z_coarse = sp["radii"].reshape(N, R, K, 1)

    sigmas_coarse, rgbs_coarse = get_sigma_rgb(wp, points, ray_dirs, params)

    n_imp = rendering_options.get("depth_resolution_importance", 0)
    coarse = integrator(rgbs_coarse, sigmas_coarse, z_coarse)
    z_fine = sample_importance(key, z_coarse, coarse["weights"], n_imp,
                               rendering_options.get("smooth_weights", True))
    points_fine = ray_origins[:, :, None, :] + z_fine * ray_dirs[:, :, None, :]
    sigmas_fine, rgbs_fine = get_sigma_rgb(wp, points_fine, ray_dirs, params)

    all_z, all_rgb, all_sig = unify_samples(z_coarse, rgbs_coarse, sigmas_coarse,
                                            z_fine, rgbs_fine, sigmas_fine)
    final = integrator(all_rgb, all_sig, all_z)
    return {**final,
            "camera_azimuthal": None, "camera_polar": None,
            "points": points_fine, "sigmas": sigmas_fine}


def init_params(key):
    k1, k2, k3, k4 = jax.random.split(key, 4)
    w1 = jax.random.normal(k1, (D_IN, HIDDEN), jnp.float32) * 0.1
    b1 = jnp.zeros((1, HIDDEN), jnp.float32)
    w2 = jax.random.normal(k2, (HIDDEN, HIDDEN), jnp.float32) * 0.1
    b2 = jnp.zeros((1, HIDDEN), jnp.float32)
    ws = jax.random.normal(k3, (HIDDEN, 1), jnp.float32) * 0.1
    bs = jnp.zeros((1, 1), jnp.float32)
    wr = jax.random.normal(k4, (HIDDEN, 3), jnp.float32) * 0.1
    br = jnp.zeros((1, 3), jnp.float32)
    return (w1, b1, w2, b2, ws, bs, wr, br)


if __name__ == "__main__":
    key = jax.random.PRNGKey(0)
    kp, kw, ku = jax.random.split(key, 3)
    params = init_params(kp)
    wp = jax.random.normal(kw, (2, WP_DIM), jnp.float32)

    rendering_options = dict(
        resolution=8,                     # H = W = 8  -> R = 64 rays
        depth_resolution=8,               # K coarse samples / ray
        depth_resolution_importance=8,    # fine samples / ray
        ray_start=0.5, ray_end=2.5,
        fov=30.0, smooth_weights=True, noise_std=0.0,
    )

    result = renderer_forward(wp, params, rendering_options, ku)
    jax.block_until_ready(result["composite_rgb"])
    jax.block_until_ready(result["composite_depth"])
    jax.block_until_ready(result["weights"])
    print("KERNEL_OK")
</pallas_src>

<mosaic_0001>
module attributes {stable_mosaic.version = 11 : i64} {
  func.func @_mlp_kernel(%arg0: i32, %arg1: i32, %arg2: memref<1x8x512xf32, #tpu.memory_space<vmem>>, %arg3: memref<1x64x1xf32, #tpu.memory_space<vmem>>, %arg4: memref<64x8xf32, #tpu.memory_space<vmem>>, %arg5: memref<64x64xf32, #tpu.memory_space<vmem>>, %arg6: memref<64x1xf32, #tpu.memory_space<vmem>>, %arg7: memref<4x64xf32, #tpu.memory_space<vmem>>, %arg8: memref<4x1xf32, #tpu.memory_space<vmem>>, %arg9: memref<1x4x512xf32, #tpu.memory_space<vmem>>) attributes {dimension_semantics = [#tpu.dimension_semantics<parallel>, #tpu.dimension_semantics<parallel>], iteration_bounds = array<i64: 2, 1>, scalar_prefetch = 0 : i64, scratch_operands = 0 : i64, tpu.core_type = #tpu.core_type<tc>, window_params = [{transform_indices = @transform_0, window_bounds = array<i64: 1, 8, 512>}, {transform_indices = @transform_1, window_bounds = array<i64: 1, 64, 1>}, {pipeline_mode = #tpu.pipeline_mode<synchronous>, transform_indices = @transform_2, window_bounds = array<i64: 64, 8>}, {pipeline_mode = #tpu.pipeline_mode<synchronous>, transform_indices = @transform_3, window_bounds = array<i64: 64, 64>}, {pipeline_mode = #tpu.pipeline_mode<synchronous>, transform_indices = @transform_4, window_bounds = array<i64: 64, 1>}, {pipeline_mode = #tpu.pipeline_mode<synchronous>, transform_indices = @transform_5, window_bounds = array<i64: 4, 64>}, {pipeline_mode = #tpu.pipeline_mode<synchronous>, transform_indices = @transform_6, window_bounds = array<i64: 4, 1>}, {transform_indices = @transform_7, window_bounds = array<i64: 1, 4, 512>}]} {
    %c0 = arith.constant 0 : index
    %c0_0 = arith.constant 0 : index
    %c0_1 = arith.constant 0 : index
    %0 = vector.load %arg2[%c0, %c0_0, %c0_1] : memref<1x8x512xf32, #tpu.memory_space<vmem>>, vector<1x8x512xf32>
    %1 = vector.shape_cast %0 : vector<1x8x512xf32> to vector<8x512xf32>
    %2 = arith.truncf %1 : vector<8x512xf32> to vector<8x512xbf16>
    %c0_2 = arith.constant 0 : index
    %c0_3 = arith.constant 0 : index
    %3 = vector.load %arg4[%c0_2, %c0_3] : memref<64x8xf32, #tpu.memory_space<vmem>>, vector<64x8xf32>
    %4 = arith.truncf %3 : vector<64x8xf32> to vector<64x8xbf16>
    %cst = arith.constant dense<0.000000e+00> : vector<64x512xf32>
    %5 = tpu.matmul %4, %2, %cst {dimension_numbers = #tpu.dot_dimension_numbers<[1], [0], [0], [1], [0, 0, 1, 1], [], []>} : vector<64x8xbf16>, vector<8x512xbf16>, vector<64x512xf32> -> vector<64x512xf32>
    %c0_4 = arith.constant 0 : index
    %c0_5 = arith.constant 0 : index
    %c0_6 = arith.constant 0 : index
    %6 = vector.load %arg3[%c0_4, %c0_5, %c0_6] : memref<1x64x1xf32, #tpu.memory_space<vmem>>, vector<1x64x1xf32>
    %7 = vector.shape_cast %6 : vector<1x64x1xf32> to vector<64x1xf32>
    %8 = vector.broadcast %7 : vector<64x1xf32> to vector<64x512xf32>
    %9 = arith.addf %5, %8 : vector<64x512xf32>
    %cst_7 = arith.constant 0.000000e+00 : f32
    %10 = vector.broadcast %cst_7 : f32 to vector<64x512xf32>
    %11 = arith.maximumf %9, %10 : vector<64x512xf32>
    %c0_8 = arith.constant 0 : index
    %c0_9 = arith.constant 0 : index
    %12 = vector.load %arg5[%c0_8, %c0_9] : memref<64x64xf32, #tpu.memory_space<vmem>>, vector<64x64xf32>
    %13 = arith.truncf %12 : vector<64x64xf32> to vector<64x64xbf16>
    %14 = arith.truncf %11 : vector<64x512xf32> to vector<64x512xbf16>
    %cst_10 = arith.constant dense<0.000000e+00> : vector<64x512xf32>
    %15 = tpu.matmul %13, %14, %cst_10 {dimension_numbers = #tpu.dot_dimension_numbers<[1], [0], [0], [1], [0, 0, 1, 1], [], []>} : vector<64x64xbf16>, vector<64x512xbf16>, vector<64x512xf32> -> vector<64x512xf32>
    %c0_11 = arith.constant 0 : index
    %c0_12 = arith.constant 0 : index
    %16 = vector.load %arg6[%c0_11, %c0_12] : memref<64x1xf32, #tpu.memory_space<vmem>>, vector<64x1xf32>
    %17 = vector.broadcast %16 : vector<64x1xf32> to vector<64x512xf32>
    %18 = arith.addf %15, %17 : vector<64x512xf32>
    %cst_13 = arith.constant 0.000000e+00 : f32
    %19 = vector.broadcast %cst_13 : f32 to vector<64x512xf32>
    %20 = arith.maximumf %18, %19 : vector<64x512xf32>
    %c0_14 = arith.constant 0 : index
    %c0_15 = arith.constant 0 : index
    %21 = vector.load %arg7[%c0_14, %c0_15] : memref<4x64xf32, #tpu.memory_space<vmem>>, vector<4x64xf32>
    %22 = arith.truncf %21 : vector<4x64xf32> to vector<4x64xbf16>
    %23 = arith.truncf %20 : vector<64x512xf32> to vector<64x512xbf16>
    %cst_16 = arith.constant dense<0.000000e+00> : vector<4x512xf32>
    %24 = tpu.matmul %22, %23, %cst_16 {dimension_numbers = #tpu.dot_dimension_numbers<[1], [0], [0], [1], [0, 0, 1, 1], [], []>} : vector<4x64xbf16>, vector<64x512xbf16>, vector<4x512xf32> -> vector<4x512xf32>
    %c0_17 = arith.constant 0 : index
    %c0_18 = arith.constant 0 : index
    %25 = vector.load %arg8[%c0_17, %c0_18] : memref<4x1xf32, #tpu.memory_space<vmem>>, vector<4x1xf32>
    %26 = vector.broadcast %25 : vector<4x1xf32> to vector<4x512xf32>
    %27 = arith.addf %24, %26 : vector<4x512xf32>
    %28 = tpu.iota {dimensions = array<i32: 0>} : vector<4x512xi32>
    %c0_i32 = arith.constant 0 : i32
    %29 = vector.broadcast %c0_i32 : i32 to vector<4x512xi32>
    %30 = arith.cmpi eq, %28, %29 : vector<4x512xi32>
    %31 = arith.negf %27 : vector<4x512xf32>
    %32 = math.exp %31 : vector<4x512xf32>
    %cst_19 = arith.constant 1.000000e+00 : f32
    %33 = vector.broadcast %cst_19 : f32 to vector<4x512xf32>
    %34 = arith.addf %33, %32 : vector<4x512xf32>
    %35 = arith.divf %33, %34 : vector<4x512xf32>
    %36 = arith.select %30, %27, %35 : vector<4x512xi1>, vector<4x512xf32>
    %c0_20 = arith.constant 0 : index
    %c0_21 = arith.constant 0 : index
    %c0_22 = arith.constant 0 : index
    %37 = vector.load %arg9[%c0_20, %c0_21, %c0_22] : memref<1x4x512xf32, #tpu.memory_space<vmem>>, vector<1x4x512xf32>
    %38 = vector.shape_cast %37 : vector<1x4x512xf32> to vector<4x512xf32>
    %39 = vector.shape_cast %36 : vector<4x512xf32> to vector<1x4x512xf32>
    tpu.vector_store %arg9[%c0_20, %c0_21, %c0_22], %39 {strides = array<i32>} : memref<1x4x512xf32, #tpu.memory_space<vmem>>, vector<1x4x512xf32>,
    return
  }
  func.func @transform_0(%arg0: i32, %arg1: i32) -> (i32, i32, i32) {
    %c0_i32 = arith.constant 0 : i32
    %c0_i32_0 = arith.constant 0 : i32
    return %arg0, %c0_i32, %arg1 : i32, i32, i32
  }
  func.func @transform_1(%arg0: i32, %arg1: i32) -> (i32, i32, i32) {
    %c0_i32 = arith.constant 0 : i32
    %c0_i32_0 = arith.constant 0 : i32
    %c0_i32_1 = arith.constant 0 : i32
    return %arg0, %c0_i32, %c0_i32_0 : i32, i32, i32
  }
  func.func @transform_2(%arg0: i32, %arg1: i32) -> (i32, i32) {
    %c0_i32 = arith.constant 0 : i32
    %c0_i32_0 = arith.constant 0 : i32
    %c0_i32_1 = arith.constant 0 : i32
    return %c0_i32, %c0_i32_0 : i32, i32
  }
  func.func @transform_3(%arg0: i32, %arg1: i32) -> (i32, i32) {
    %c0_i32 = arith.constant 0 : i32
    %c0_i32_0 = arith.constant 0 : i32
    %c0_i32_1 = arith.constant 0 : i32
    return %c0_i32, %c0_i32_0 : i32, i32
  }
  func.func @transform_4(%arg0: i32, %arg1: i32) -> (i32, i32) {
    %c0_i32 = arith.constant 0 : i32
    %c0_i32_0 = arith.constant 0 : i32
    %c0_i32_1 = arith.constant 0 : i32
    return %c0_i32, %c0_i32_0 : i32, i32
  }
  func.func @transform_5(%arg0: i32, %arg1: i32) -> (i32, i32) {
    %c0_i32 = arith.constant 0 : i32
    %c0_i32_0 = arith.constant 0 : i32
    %c0_i32_1 = arith.constant 0 : i32
    return %c0_i32, %c0_i32_0 : i32, i32
  }
  func.func @transform_6(%arg0: i32, %arg1: i32) -> (i32, i32) {
    %c0_i32 = arith.constant 0 : i32
    %c0_i32_0 = arith.constant 0 : i32
    %c0_i32_1 = arith.constant 0 : i32
    return %c0_i32, %c0_i32_0 : i32, i32
  }
  func.func @transform_7(%arg0: i32, %arg1: i32) -> (i32, i32, i32) {
    %c0_i32 = arith.constant 0 : i32
    %c0_i32_0 = arith.constant 0 : i32
    return %arg0, %c0_i32, %arg1 : i32, i32, i32
  }
}

</mosaic_0001>

<llo_original>
// kernel: tpu_custom_call.1
$region0: #{tpu_custom_call.1}
  #allocation0 [shape = 'u32[]', space=smem, size = 0x4, offset = 0x4, fixed_abs, tag = 'smem constant byte address 0x4 - core index']
  #allocation1 [shape = 'u32[72,128]{1,0:T(1,128)}', space=vmem, size = 0x9000, scoped, tag = 'internal scratch']
  %s0 = inlined_call_operand.vmem [shape: f32[2,8,512], index: 0, kind: input, shape index: {}]
  %s1 = inlined_call_operand.vmem [shape: f32[2,64,1], index: 1, kind: input, shape index: {}]
  %s2 = inlined_call_operand.vmem [shape: f32[64,8], index: 2, kind: input, shape index: {}]
  %s3 = inlined_call_operand.vmem [shape: f32[64,64], index: 3, kind: input, shape index: {}]
  %s4 = inlined_call_operand.vmem [shape: f32[64,1], index: 4, kind: input, shape index: {}]
  %s5 = inlined_call_operand.vmem [shape: f32[4,64], index: 5, kind: input, shape index: {}]
  %s6 = inlined_call_operand.vmem [shape: f32[4,1], index: 6, kind: input, shape index: {}]
  %s7 = inlined_call_operand.hbm [shape: f32[2,4,512], index: 7, kind: output, shape index: {}]
  %s8 = sld [smem:[#allocation0]]
  $region61: #{tpu_custom_call.1} parent=0
    _
  %s10 = ssub.s32 1, %s8
  %s11 = scalar_select 0, %s10, %s8
  $region1: #{tpu_custom_call.1} parent=0
    #allocation2 [shape = 'u8[16384]{0}', space=vmem, size = 0x4000, scoped, tag = 'output window, operand 0']
    #allocation3 [shape = 's32[2]{0}', space=sflag, size = 0x8, scoped, tag = 'scoped memory for tpu_custom_call.1']
    %12 = vsyncpa [#allocation3], 0
    %s13 = scalar_lea.sflag [#allocation3], 1
    %14 = vsyncpa %s13, 0
    loop: start=0, step=1, limit=4
    $region2: #{tpu_custom_call.1} parent=1 // loop_pre_header
      _
    $region3: #{tpu_custom_call.1} parent=1 // loop_header
      %s16 = sphi 0, %s20
      %p17 = scmp.ge.s32.totalorder %s16, 4
      %s23 = sphi 0, %s35
      %s24 = sphi 0, %s31
      %s25 = sphi 0, %s23
      %s26 = sphi 0, %s24
      %s27 = sphi 0, %s25
      %s28 = sphi 0, %s26
      %s40 = sphi 0, %s42
      %s43 = sphi 0, %s40
      %s44 = sphi 0, %s43
      %s60 = sphi 0, %s44
      %s66 = sphi 0, %s68
      %s69 = sphi 0, %s66
      %s70 = sphi 0, %s69
      %s86 = sphi 0, %s70
      %s90 = sphi 0, %s90
      %s92 = sphi 0, %s90
      %s93 = sphi 0, %s92
      %s107 = sphi 0, %s93
      %s111 = sphi 0, %s111
      %s113 = sphi 0, %s111
      %s114 = sphi 0, %s113
      %s128 = sphi 0, %s114
      %s132 = sphi 0, %s132
      %s134 = sphi 0, %s132
      %s135 = sphi 0, %s134
      %s149 = sphi 0, %s135
      %s153 = sphi 0, %s153
      %s155 = sphi 0, %s153
      %s156 = sphi 0, %s155
      %s170 = sphi 0, %s156
      %s174 = sphi 0, %s174
      %s176 = sphi 0, %s174
      %s177 = sphi 0, %s176
      %s191 = sphi 0, %s177
      %s199 = sphi 0, %s201
      %s202 = sphi 0, %s199
      %s203 = sphi 0, %s202
      %s219 = sphi 0, %s203
    $region4: #{tpu_custom_call.1} parent=1 // loop_header_branch
      %19 = sbr.rel (%p17) target = $region8
    $region5: #{tpu_custom_call.1} parent=1 // loop_body
      %s21 = ssub.s32 %s16, 1
      %s22 = ssub.s32 %s16, 2
      %s29 = sadd.s32 1, %s24
      %p30 = scmp.ge.s32.totalorder %s29, 1
      %s31 = scalar_select %p30, 0, %s29
      %s32 = sadd.s32 1, %s23
      %s33 = scalar_select %p30, %s32, %s23
      %p34 = scmp.ge.s32.totalorder %s33, 2
      %s35 = scalar_select %p34, 0, %s33
      %s36 = ssub.s32 %s23, %s35
      %s37 = ssub.s32 %s24, %s31
      %s38 = sor.u32 %s36, %s37
      %p39 = scmp.eq.s32.totalorder %s38, 0
      %s41 = sadd.s32 %s40, 1
      %s42 = scalar_select %p39, %s40, %s41
      %p45 = pneg %p39
      %p46 = scmp.eq.s32.totalorder %s16, 1
      %p47 = por %p45, %p46
      %p48 = scmp.ne.s32.totalorder %s40, %s43
      %p49 = scmp.eq.s32.totalorder %s16, 0
      %p50 = por %p48, %p49
      %p51 = scmp.ne.s32.totalorder %s40, %s43
      %p52 = scmp.eq.s32.totalorder %s21, 1
      %p53 = por %p51, %p52
      %p54 = scmp.ne.s32.totalorder %s43, %s44
      %p55 = scmp.eq.s32.totalorder %s21, 0
      %p56 = por %p54, %p55
      %p57 = scmp.ne.s32.totalorder %s43, %s44
      %p58 = scmp.eq.s32.totalorder %s22, 1
      %p59 = por %p57, %p58
      %p61 = scmp.ne.s32.totalorder %s44, %s60
      %p62 = scmp.eq.s32.totalorder %s22, 0
      %p63 = por %p61, %p62
      %s64 = ssub.s32 %s23, %s35
      %p65 = scmp.eq.s32.totalorder %s64, 0
      %s67 = sadd.s32 %s66, 1
      %s68 = scalar_select %p65, %s66, %s67
      %p71 = pneg %p65
      %p72 = scmp.eq.s32.totalorder %s16, 1
      %p73 = por %p71, %p72
      %p74 = scmp.ne.s32.totalorder %s66, %s69
      %p75 = scmp.eq.s32.totalorder %s16, 0
      %p76 = por %p74, %p75
      %p77 = scmp.ne.s32.totalorder %s66, %s69
      %p78 = scmp.eq.s32.totalorder %s21, 1
      %p79 = por %p77, %p78
      %p80 = scmp.ne.s32.totalorder %s69, %s70
      %p81 = scmp.eq.s32.totalorder %s21, 0
      %p82 = por %p80, %p81
      %p83 = scmp.ne.s32.totalorder %s69, %s70
      %p84 = scmp.eq.s32.totalorder %s22, 1
      %p85 = por %p83, %p84
      %p87 = scmp.ne.s32.totalorder %s70, %s86
      %p88 = scmp.eq.s32.totalorder %s22, 0
      %p89 = por %p87, %p88
      %s91 = sadd.s32 %s90, 1
      %p94 = scmp.eq.s32.totalorder %s16, 1
      %p95 = scmp.ne.s32.totalorder %s90, %s92
      %p96 = scmp.eq.s32.totalorder %s16, 0
      %p97 = por %p95, %p96
      %p98 = scmp.ne.s32.totalorder %s90, %s92
      %p99 = scmp.eq.s32.totalorder %s21, 1
      %p100 = por %p98, %p99
      %p101 = scmp.ne.s32.totalorder %s92, %s93
      %p102 = scmp.eq.s32.totalorder %s21, 0
      %p103 = por %p101, %p102
      %p104 = scmp.ne.s32.totalorder %s92, %s93
      %p105 = scmp.eq.s32.totalorder %s22, 1
      %p106 = por %p104, %p105
      %p108 = scmp.ne.s32.totalorder %s93, %s107
      %p109 = scmp.eq.s32.totalorder %s22, 0
      %p110 = por %p108, %p109
      %s112 = sadd.s32 %s111, 1
      %p115 = scmp.eq.s32.totalorder %s16, 1
      %p116 = scmp.ne.s32.totalorder %s111, %s113
      %p117 = scmp.eq.s32.totalorder %s16, 0
      %p118 = por %p116, %p117
      %p119 = scmp.ne.s32.totalorder %s111, %s113
      %p120 = scmp.eq.s32.totalorder %s21, 1
      %p121 = por %p119, %p120
      %p122 = scmp.ne.s32.totalorder %s113, %s114
      %p123 = scmp.eq.s32.totalorder %s21, 0
      %p124 = por %p122, %p123
      %p125 = scmp.ne.s32.totalorder %s113, %s114
      %p126 = scmp.eq.s32.totalorder %s22, 1
      %p127 = por %p125, %p126
      %p129 = scmp.ne.s32.totalorder %s114, %s128
      %p130 = scmp.eq.s32.totalorder %s22, 0
      %p131 = por %p129, %p130
      %s133 = sadd.s32 %s132, 1
      %p136 = scmp.eq.s32.totalorder %s16, 1
      %p137 = scmp.ne.s32.totalorder %s132, %s134
      %p138 = scmp.eq.s32.totalorder %s16, 0
      %p139 = por %p137, %p138
      %p140 = scmp.ne.s32.totalorder %s132, %s134
      %p141 = scmp.eq.s32.totalorder %s21, 1
      %p142 = por %p140, %p141
      %p143 = scmp.ne.s32.totalorder %s134, %s135
      %p144 = scmp.eq.s32.totalorder %s21, 0
      %p145 = por %p143, %p144
      %p146 = scmp.ne.s32.totalorder %s134, %s135
      %p147 = scmp.eq.s32.totalorder %s22, 1
      %p148 = por %p146, %p147
      %p150 = scmp.ne.s32.totalorder %s135, %s149
      %p151 = scmp.eq.s32.totalorder %s22, 0
      %p152 = por %p150, %p151
      %s154 = sadd.s32 %s153, 1
      %p157 = scmp.eq.s32.totalorder %s16, 1
      %p158 = scmp.ne.s32.totalorder %s153, %s155
      %p159 = scmp.eq.s32.totalorder %s16, 0
      %p160 = por %p158, %p159
      %p161 = scmp.ne.s32.totalorder %s153, %s155
      %p162 = scmp.eq.s32.totalorder %s21, 1
      %p163 = por %p161, %p162
      %p164 = scmp.ne.s32.totalorder %s155, %s156
      %p165 = scmp.eq.s32.totalorder %s21, 0
      %p166 = por %p164, %p165
      %p167 = scmp.ne.s32.totalorder %s155, %s156
      %p168 = scmp.eq.s32.totalorder %s22, 1
      %p169 = por %p167, %p168
      %p171 = scmp.ne.s32.totalorder %s156, %s170
      %p172 = scmp.eq.s32.totalorder %s22, 0
      %p173 = por %p171, %p172
      %s175 = sadd.s32 %s174, 1
      %p178 = scmp.eq.s32.totalorder %s16, 1
      %p179 = scmp.ne.s32.totalorder %s174, %s176
      %p180 = scmp.eq.s32.totalorder %s16, 0
      %p181 = por %p179, %p180
      %p182 = scmp.ne.s32.totalorder %s174, %s176
      %p183 = scmp.eq.s32.totalorder %s21, 1
      %p184 = por %p182, %p183
      %p185 = scmp.ne.s32.totalorder %s176, %s177
      %p186 = scmp.eq.s32.totalorder %s21, 0
      %p187 = por %p185, %p186
      %p188 = scmp.ne.s32.totalorder %s176, %s177
      %p189 = scmp.eq.s32.totalorder %s22, 1
      %p190 = por %p188, %p189
      %p192 = scmp.ne.s32.totalorder %s177, %s191
      %p193 = scmp.eq.s32.totalorder %s22, 0
      %p194 = por %p192, %p193
      %s195 = ssub.s32 %s23, %s35
      %s196 = ssub.s32 %s24, %s31
      %s197 = sor.u32 %s195, %s196
      %p198 = scmp.eq.s32.totalorder %s197, 0
      %s200 = sadd.s32 %s199, 1
      %s201 = scalar_select %p198, %s199, %s200
      %p204 = pneg %p198
      %p205 = scmp.eq.s32.totalorder %s16, 1
      %p206 = por %p204, %p205
      %p207 = scmp.ne.s32.totalorder %s199, %s202
      %p208 = scmp.eq.s32.totalorder %s16, 0
      %p209 = por %p207, %p208
      %p210 = scmp.ne.s32.totalorder %s199, %s202
      %p211 = scmp.eq.s32.totalorder %s21, 1
      %p212 = por %p210, %p211
      %p213 = scmp.ne.s32.totalorder %s202, %s203
      %p214 = scmp.eq.s32.totalorder %s21, 0
      %p215 = por %p213, %p214
      %p216 = scmp.ne.s32.totalorder %s202, %s203
      %p217 = scmp.eq.s32.totalorder %s22, 1
      %p218 = por %p216, %p217
      %p220 = scmp.ne.s32.totalorder %s203, %s219
      %p221 = scmp.eq.s32.totalorder %s22, 0
      %p222 = por %p220, %p221
      %p223 = scmp.le.s32.totalorder 1, %s16
      %p224 = scmp.lt.s32.totalorder %s16, 3
      %p225 = pnand %p223, %p224
      %p226 = pneg %p225
      // Predicated region
      $region9: #{tpu_custom_call.1} parent=5 // pred_check
        _
      $region10: #{tpu_custom_call.1} parent=5 // pred_check_branch
        %228 = sbr.rel (%p225) target = $region12
      $region11: #{tpu_custom_call.1} parent=5 // pred_region
        %s229 = ssub.s32 %s16, 1
        // Predicated region
        $region13: #{tpu_custom_call.1} parent=11 // pred_check
          %p230 = pneg %p103
        $region14: #{tpu_custom_call.1} parent=11 // pred_check_branch
          %232 = sbr.rel (%p230) target = $region16
        $region15: #{tpu_custom_call.1} parent=11 // pred_region
          _
        $region16: #{tpu_custom_call.1} parent=11 // pred_fallthru
          _
        // Predicated region
        $region17: #{tpu_custom_call.1} parent=11 // pred_check
          %p233 = pneg %p124
        $region18: #{tpu_custom_call.1} parent=11 // pred_check_branch
          %235 = sbr.rel (%p233) target = $region20
        $region19: #{tpu_custom_call.1} parent=11 // pred_region
          _
        $region20: #{tpu_custom_call.1} parent=11 // pred_fallthru
          _
        // Predicated region
        $region21: #{tpu_custom_call.1} parent=11 // pred_check
          %p236 = pneg %p145
        $region22: #{tpu_custom_call.1} parent=11 // pred_check_branch
          %238 = sbr.rel (%p236) target = $region24
        $region23: #{tpu_custom_call.1} parent=11 // pred_region
          _
        $region24: #{tpu_custom_call.1} parent=11 // pred_fallthru
          _
        // Predicated region
        $region25: #{tpu_custom_call.1} parent=11 // pred_check
          %p239 = pneg %p166
        $region26: #{tpu_custom_call.1} parent=11 // pred_check_branch
          %241 = sbr.rel (%p239) target = $region28
        $region27: #{tpu_custom_call.1} parent=11 // pred_region
          _
        $region28: #{tpu_custom_call.1} parent=11 // pred_fallthru
          _
        // Predicated region
        $region29: #{tpu_custom_call.1} parent=11 // pred_check
          %p242 = pneg %p187
        $region30: #{tpu_custom_call.1} parent=11 // pred_check_branch
          %244 = sbr.rel (%p242) target = $region32
        $region31: #{tpu_custom_call.1} parent=11 // pred_region
          _
        $region32: #{tpu_custom_call.1} parent=11 // pred_fallthru
          _
      $region12: #{tpu_custom_call.1} parent=5 // pred_fallthru
        _
      %p245 = scmp.lt.s32.totalorder %s16, 2
      // Predicated region
      $region33: #{tpu_custom_call.1} parent=5 // pred_check
        %p246 = pneg %p245
      $region34: #{tpu_custom_call.1} parent=5 // pred_check_branch
        %248 = sbr.rel (%p246) target = $region36
      $region35: #{tpu_custom_call.1} parent=5 // pred_region
        // Predicated region
        $region37: #{tpu_custom_call.1} parent=35 // pred_check
          %p249 = pneg %p50
        $region38: #{tpu_custom_call.1} parent=35 // pred_check_branch
          %251 = sbr.rel (%p249) target = $region40
        $region39: #{tpu_custom_call.1} parent=35 // pred_region
          %s252 = smul.u32 4, %s24
          %p253 = scmp.lt.s32.totalorder %s23, 1
          %s254 = scalar_select %p253, %s23, 1
          %p255 = scmp.lt.s32.totalorder %s252, 3
          %s256 = scalar_select %p255, %s252, 3
          %s257 = smul.addr %s254, 4
          %s258 = sadd.s32 %s256, %s257
          %s259 = smul.addr %s258, 8
          %s260 = scalar_lea.vmem %s0, %s259
          %s261 = smul.u32 4, %s24
        $region40: #{tpu_custom_call.1} parent=35 // pred_fallthru
          _
        // Predicated region
        $region41: #{tpu_custom_call.1} parent=35 // pred_check
          %p262 = pneg %p76
        $region42: #{tpu_custom_call.1} parent=35 // pred_check_branch
          %264 = sbr.rel (%p262) target = $region44
        $region43: #{tpu_custom_call.1} parent=35 // pred_region
          %p265 = scmp.lt.s32.totalorder %s23, 1
          %s266 = scalar_select %p265, %s23, 1
          %s267 = smul.addr %s266, 8
          %s268 = smul.addr %s267, 8
          %s269 = scalar_lea.vmem %s1, %s268
        $region44: #{tpu_custom_call.1} parent=35 // pred_fallthru
          _
      $region36: #{tpu_custom_call.1} parent=5 // pred_fallthru
        _
      %p270 = scmp.le.s32.totalorder 1, %s16
      %p271 = scmp.lt.s32.totalorder %s16, 3
      %p272 = pnand %p270, %p271
      %p273 = pneg %p272
      // Predicated region
      $region45: #{tpu_custom_call.1} parent=5 // pred_check
        _
      $region46: #{tpu_custom_call.1} parent=5 // pred_check_branch
        %275 = sbr.rel (%p272) target = $region48
      $region47: #{tpu_custom_call.1} parent=5 // pred_region
        %s276 = ssub.s32 %s16, 1
        %s277 = smul.u32 4, %s26
        %p278 = scmp.lt.s32.totalorder %s25, 1
        %s279 = scalar_select %p278, %s25, 1
        %p280 = scmp.lt.s32.totalorder %s277, 3
        %s281 = scalar_select %p280, %s277, 3
        %s282 = smul.addr %s279, 4
        %s283 = sadd.s32 %s281, %s282
        %s284 = smul.addr %s283, 8
        %s285 = scalar_lea.vmem %s0, %s284
        %p286 = pneg %p56
        %p287 = pneg %p53
        %p288 = scmp.lt.s32.totalorder %s25, 1
        %s289 = scalar_select %p288, %s25, 1
        %s290 = smul.addr %s289, 8
        %s291 = smul.addr %s290, 8
        %s292 = scalar_lea.vmem %s1, %s291
        %p293 = pneg %p82
        %p294 = pneg %p79
        %p295 = pneg %p103
        %p296 = pneg %p100
        %p297 = pneg %p124
        %p298 = pneg %p121
        %p299 = pneg %p145
        %p300 = pneg %p142
        %p301 = pneg %p166
        %p302 = pneg %p163
        %p303 = pneg %p187
        %p304 = pneg %p184
        %p305 = pneg %p215
        %p306 = pneg %p212
        %s307 = sand.u32 %s202, 1
        %s308 = scalar_lea.sflag [#allocation3], %s307
        %s309 = sand.u32 %s202, 1
        %s310 = smul.addr %s309, 16
        %s311 = scalar_lea.vmem [#allocation2], %s310
        %s312 = smul.u32 4, %s26
        %p313 = scmp.lt.s32.totalorder %s25, 1
        %s314 = scalar_select %p313, %s25, 1
        %p315 = scmp.lt.s32.totalorder %s312, 3
        %s316 = scalar_select %p315, %s312, 3
        %s317 = smul.addr %s314, 4
        %s318 = sadd.s32 %s316, %s317
        %s319 = smul.addr %s318, 8
        %s320 = scalar_lea.vmem %s0, %s319
        %s321 = smul.u32 4, %s26
        %p322 = scmp.lt.s32.totalorder %s25, 1
        %s323 = scalar_select %p322, %s25, 1
        %s324 = smul.addr %s323, 8
        %s325 = smul.addr %s324, 8
        %s326 = scalar_lea.vmem %s1, %s325
        %s327 = smul.u32 4, %s26
        %v329 = vld [vmem:[%s320] sm:$0xff]
        %v330 = vld [vmem:[%s320 + $0x8] sm:$0xff]
        %v331 = vld [vmem:[%s320 + $0x10] sm:$0xff]
        %v332 = vld [vmem:[%s320 + $0x18] sm:$0xff]
        %v333 = vpack.c.bf16 %v329, %v329
        %v334 = vpack.c.bf16 %v330, %v330
        %v335 = vpack.c.bf16 %v331, %v331
        %v336 = vpack.c.bf16 %v332, %v332
        %v337 = vld [vmem:[%s2] sm:$0xff]
        %v338 = vld [vmem:[%s2 + $0x8] sm:$0xff]
        %v339 = vld [vmem:[%s2 + $0x10] sm:$0xff]
        %v340 = vld [vmem:[%s2 + $0x18] sm:$0xff]
        %v341 = vld [vmem:[%s2 + $0x20] sm:$0xff]
        %v342 = vld [vmem:[%s2 + $0x28] sm:$0xff]
        %v343 = vld [vmem:[%s2 + $0x30] sm:$0xff]
        %v344 = vld [vmem:[%s2 + $0x38] sm:$0xff]
        %v345 = vpack.c.bf16 %v338, %v337
        %v346 = vpack.c.bf16 %v340, %v339
        %v347 = vpack.c.bf16 %v342, %v341
        %v348 = vpack.c.bf16 %v344, %v343
        %v349 = vld [vmem:[%s326] sm:$0xff]
        %v350 = vld [vmem:[%s326 + $0x8] sm:$0xff]
        %v351 = vld [vmem:[%s326 + $0x10] sm:$0xff]
        %v352 = vld [vmem:[%s326 + $0x18] sm:$0xff]
        %v353 = vld [vmem:[%s326 + $0x20] sm:$0xff]
        %v354 = vld [vmem:[%s326 + $0x28] sm:$0xff]
        %v355 = vld [vmem:[%s326 + $0x30] sm:$0xff]
        %v356 = vld [vmem:[%s326 + $0x38] sm:$0xff]
        %358 = vset.pattern.permute.xlu0 0
        %359 = vperm.xlu0 %358, %v349
        %v360 = vpop.permute.xlu0 %359
        %363 = vset.pattern.permute.xlu0 0
        %364 = vperm.xlu0 %363, %v350
        %v365 = vpop.permute.xlu0 %364
        %368 = vset.pattern.permute.xlu0 0
        %369 = vperm.xlu0 %368, %v351
        %v370 = vpop.permute.xlu0 %369
        %373 = vset.pattern.permute.xlu0 0
        %374 = vperm.xlu0 %373, %v352
        %v375 = vpop.permute.xlu0 %374
        %378 = vset.pattern.permute.xlu0 0
        %379 = vperm.xlu0 %378, %v353
        %v380 = vpop.permute.xlu0 %379
        %383 = vset.pattern.permute.xlu0 0
        %384 = vperm.xlu0 %383, %v354
        %v385 = vpop.permute.xlu0 %384
        %388 = vset.pattern.permute.xlu0 0
        %389 = vperm.xlu0 %388, %v355
        %v390 = vpop.permute.xlu0 %389
        %393 = vset.pattern.permute.xlu0 0
        %394 = vperm.xlu0 %393, %v356
        %v395 = vpop.permute.xlu0 %394
        %vm397 = vcmask 64512
        %v399 = vsel %vm397, %v345, 0
        %v402 = vsel %vm397, %v346, 0
        %v405 = vsel %vm397, %v347, 0
        %v408 = vsel %vm397, %v348, 0
        %vm410 = vcmask 1043456
        %v412 = vsel %vm410, %v333, 0
        %v415 = vsel %vm410, %v334, 0
        %v418 = vsel %vm410, %v335, 0
        %v421 = vsel %vm410, %v336, 0
        %423 = vmatpush.bf16.msra.mxu0 0
        %424 = vmatpush.bf16.msra.mxu0 0
        %425 = vmatpush.bf16.msra.mxu0 0
        %426 = vmatpush.bf16.msra.mxu0 0
        %427 = vmatpush.bf16.msra.mxu0 0
        %428 = vmatpush.bf16.msra.mxu0 0
        %429 = vmatpush.bf16.msra.mxu0 0
        %430 = vmatpush.bf16.msra.mxu0 %v412
        %431 = vmatmul.bf16.gmra.mxu0 %v399
        %v432 = vpop.f32.mrf.mxu0
        %v433 = vadd.f32 %v360, %v432
        %v434 = vpop.f32.mrf.mxu0
        %v435 = vadd.f32 %v365, %v434
        %436 = vmatmul.bf16.gmra.mxu0 %v402
        %v437 = vpop.f32.mrf.mxu0
        %v438 = vadd.f32 %v370, %v437
        %v439 = vpop.f32.mrf.mxu0
        %v440 = vadd.f32 %v375, %v439
        %441 = vmatmul.bf16.gmra.mxu0 %v405
        %v442 = vpop.f32.mrf.mxu0
        %v443 = vadd.f32 %v380, %v442
        %v444 = vpop.f32.mrf.mxu0
        %v445 = vadd.f32 %v385, %v444
        %446 = vmatmul.bf16.gmra.mxu0 %v408
        %v447 = vpop.f32.mrf.mxu0
        %v448 = vadd.f32 %v390, %v447
        %v449 = vpop.f32.mrf.mxu0
        %v450 = vadd.f32 %v395, %v449
        %451 = vdwg.mxu0
        %452 = vmatpush.bf16.msra.mxu0 0
        %453 = vmatpush.bf16.msra.mxu0 0
        %454 = vmatpush.bf16.msra.mxu0 0
        %455 = vmatpush.bf16.msra.mxu0 0
        %456 = vmatpush.bf16.msra.mxu0 0
        %457 = vmatpush.bf16.msra.mxu0 0
        %458 = vmatpush.bf16.msra.mxu0 0
        %459 = vmatpush.bf16.msra.mxu0 %v415
        %460 = vmatmul.bf16.gmra.mxu0 %v399
        %v461 = vpop.f32.mrf.mxu0
        %v462 = vadd.f32 %v360, %v461
        %v463 = vpop.f32.mrf.mxu0
        %v464 = vadd.f32 %v365, %v463
        %465 = vmatmul.bf16.gmra.mxu0 %v402
        %v466 = vpop.f32.mrf.mxu0
        %v467 = vadd.f32 %v370, %v466
        %v468 = vpop.f32.mrf.mxu0
        %v469 = vadd.f32 %v375, %v468
        %470 = vmatmul.bf16.gmra.mxu0 %v405
        %v471 = vpop.f32.mrf.mxu0
        %v472 = vadd.f32 %v380, %v471
        %v473 = vpop.f32.mrf.mxu0
        %v474 = vadd.f32 %v385, %v473
        %475 = vmatmul.bf16.gmra.mxu0 %v408
        %v476 = vpop.f32.mrf.mxu0
        %v477 = vadd.f32 %v390, %v476
        %v478 = vpop.f32.mrf.mxu0
        %v479 = vadd.f32 %v395, %v478
        %480 = vdwg.mxu0
        %481 = vmatpush.bf16.msra.mxu0 0
        %482 = vmatpush.bf16.msra.mxu0 0
        %483 = vmatpush.bf16.msra.mxu0 0
        %484 = vmatpush.bf16.msra.mxu0 0
        %485 = vmatpush.bf16.msra.mxu0 0
        %486 = vmatpush.bf16.msra.mxu0 0
        %487 = vmatpush.bf16.msra.mxu0 0
        %488 = vmatpush.bf16.msra.mxu0 %v418
        %489 = vmatmul.bf16.gmra.mxu0 %v399
        %v490 = vpop.f32.mrf.mxu0
        %v491 = vadd.f32 %v360, %v490
        %v492 = vpop.f32.mrf.mxu0
        %v493 = vadd.f32 %v365, %v492
        %494 = vmatmul.bf16.gmra.mxu0 %v402
        %v495 = vpop.f32.mrf.mxu0
        %v496 = vadd.f32 %v370, %v495
        %v497 = vpop.f32.mrf.mxu0
        %v498 = vadd.f32 %v375, %v497
        %499 = vmatmul.bf16.gmra.mxu0 %v405
        %v500 = vpop.f32.mrf.mxu0
        %v501 = vadd.f32 %v380, %v500
        %v502 = vpop.f32.mrf.mxu0
        %v503 = vadd.f32 %v385, %v502
        %504 = vmatmul.bf16.gmra.mxu0 %v408
        %v505 = vpop.f32.mrf.mxu0
        %v506 = vadd.f32 %v390, %v505
        %v507 = vpop.f32.mrf.mxu0
        %v508 = vadd.f32 %v395, %v507
        %509 = vdwg.mxu0
        %510 = vmatpush.bf16.msra.mxu0 0
        %511 = vmatpush.bf16.msra.mxu0 0
        %512 = vmatpush.bf16.msra.mxu0 0
        %513 = vmatpush.bf16.msra.mxu0 0
        %514 = vmatpush.bf16.msra.mxu0 0
        %515 = vmatpush.bf16.msra.mxu0 0
        %516 = vmatpush.bf16.msra.mxu0 0
        %517 = vmatpush.bf16.msra.mxu0 %v421
        %518 = vmatmul.bf16.gmra.mxu0 %v399
        %v519 = vpop.f32.mrf.mxu0
        %v520 = vadd.f32 %v360, %v519
        %v521 = vpop.f32.mrf.mxu0
        %v522 = vadd.f32 %v365, %v521
        %523 = vmatmul.bf16.gmra.mxu0 %v402
        %v524 = vpop.f32.mrf.mxu0
        %v525 = vadd.f32 %v370, %v524
        %v526 = vpop.f32.mrf.mxu0
        %v527 = vadd.f32 %v375, %v526
        %528 = vmatmul.bf16.gmra.mxu0 %v405
        %v529 = vpop.f32.mrf.mxu0
        %v530 = vadd.f32 %v380, %v529
        %v531 = vpop.f32.mrf.mxu0
        %v532 = vadd.f32 %v385, %v531
        %533 = vmatmul.bf16.gmra.mxu0 %v408
        %v534 = vpop.f32.mrf.mxu0
        %v535 = vadd.f32 %v390, %v534
        %v536 = vpop.f32.mrf.mxu0
        %v537 = vadd.f32 %v395, %v536
        %538 = vdwg.mxu0
        %v539 = vmax.f32 %v433, 0.0
        %v540 = vmax.f32 %v462, 0.0
        %v541 = vmax.f32 %v491, 0.0
        %v542 = vmax.f32 %v520, 0.0
        %v543 = vmax.f32 %v435, 0.0
        %v544 = vmax.f32 %v464, 0.0
        %v545 = vmax.f32 %v493, 0.0
        %v546 = vmax.f32 %v522, 0.0
        %v547 = vmax.f32 %v438, 0.0
        %v548 = vmax.f32 %v467, 0.0
        %v549 = vmax.f32 %v496, 0.0
        %v550 = vmax.f32 %v525, 0.0
        %v551 = vmax.f32 %v440, 0.0
        %v552 = vmax.f32 %v469, 0.0
        %v553 = vmax.f32 %v498, 0.0
        %v554 = vmax.f32 %v527, 0.0
        %v555 = vmax.f32 %v443, 0.0
        %v556 = vmax.f32 %v472, 0.0
        %v557 = vmax.f32 %v501, 0.0
        %v558 = vmax.f32 %v530, 0.0
        %v559 = vmax.f32 %v445, 0.0
        %v560 = vmax.f32 %v474, 0.0
        %v561 = vmax.f32 %v503, 0.0
        %v562 = vmax.f32 %v532, 0.0
        %v563 = vmax.f32 %v448, 0.0
        %v564 = vmax.f32 %v477, 0.0
        %v565 = vmax.f32 %v506, 0.0
        %v566 = vmax.f32 %v535, 0.0
        %v567 = vmax.f32 %v450, 0.0
        %v568 = vmax.f32 %v479, 0.0
        %v569 = vmax.f32 %v508, 0.0
        %v570 = vmax.f32 %v537, 0.0
        %v571 = vld [vmem:[%s3] sm:$0xff]
        %v572 = vld [vmem:[%s3 + $0x8] sm:$0xff]
        %v573 = vld [vmem:[%s3 + $0x10] sm:$0xff]
        %v574 = vld [vmem:[%s3 + $0x18] sm:$0xff]
        %v575 = vld [vmem:[%s3 + $0x20] sm:$0xff]
        %v576 = vld [vmem:[%s3 + $0x28] sm:$0xff]
        %v577 = vld [vmem:[%s3 + $0x30] sm:$0xff]
        %v578 = vld [vmem:[%s3 + $0x38] sm:$0xff]
        %v579 = vpack.c.bf16 %v572, %v571
        %v580 = vpack.c.bf16 %v574, %v573
        %v581 = vpack.c.bf16 %v576, %v575
        %v582 = vpack.c.bf16 %v578, %v577
        %v583 = vpack.c.bf16 %v543, %v539
        %v584 = vpack.c.bf16 %v544, %v540
        %v585 = vpack.c.bf16 %v545, %v541
        %v586 = vpack.c.bf16 %v546, %v542
        %v587 = vpack.c.bf16 %v551, %v547
        %v588 = vpack.c.bf16 %v552, %v548
        %v589 = vpack.c.bf16 %v553, %v549
        %v590 = vpack.c.bf16 %v554, %v550
        %v591 = vpack.c.bf16 %v559, %v555
        %v592 = vpack.c.bf16 %v560, %v556
        %v593 = vpack.c.bf16 %v561, %v557
        %v594 = vpack.c.bf16 %v562, %v558
        %v595 = vpack.c.bf16 %v567, %v563
        %v596 = vpack.c.bf16 %v568, %v564
        %v597 = vpack.c.bf16 %v569, %v565
        %v598 = vpack.c.bf16 %v570, %v566
        %v599 = vld [vmem:[%s4] sm:$0xff]
        %v600 = vld [vmem:[%s4 + $0x8] sm:$0xff]
        %v601 = vld [vmem:[%s4 + $0x10] sm:$0xff]
        %v602 = vld [vmem:[%s4 + $0x18] sm:$0xff]
        %v603 = vld [vmem:[%s4 + $0x20] sm:$0xff]
        %v604 = vld [vmem:[%s4 + $0x28] sm:$0xff]
        %v605 = vld [vmem:[%s4 + $0x30] sm:$0xff]
        %v606 = vld [vmem:[%s4 + $0x38] sm:$0xff]
        %608 = vset.pattern.permute.xlu0 0
        %609 = vperm.xlu0 %608, %v599
        %v610 = vpop.permute.xlu0 %609
        %613 = vset.pattern.permute.xlu0 0
        %614 = vperm.xlu0 %613, %v600
        %v615 = vpop.permute.xlu0 %614
        %618 = vset.pattern.permute.xlu0 0
        %619 = vperm.xlu0 %618, %v601
        %v620 = vpop.permute.xlu0 %619
        %623 = vset.pattern.permute.xlu0 0
        %624 = vperm.xlu0 %623, %v602
        %v625 = vpop.permute.xlu0 %624
        %628 = vset.pattern.permute.xlu0 0
        %629 = vperm.xlu0 %628, %v603
        %v630 = vpop.permute.xlu0 %629
        %633 = vset.pattern.permute.xlu0 0
        %634 = vperm.xlu0 %633, %v604
        %v635 = vpop.permute.xlu0 %634
        %638 = vset.pattern.permute.xlu0 0
        %639 = vperm.xlu0 %638, %v605
        %v640 = vpop.permute.xlu0 %639
        %643 = vset.pattern.permute.xlu0 0
        %644 = vperm.xlu0 %643, %v606
        %v645 = vpop.permute.xlu0 %644
        %vm647 = vcmask 523264
        %v649 = vsel %vm647, %v579, 0
        %v652 = vsel %vm647, %v580, 0
        %v655 = vsel %vm647, %v581, 0
        %v658 = vsel %vm647, %v582, 0
        %660 = vmatpush.bf16.msra.mxu0 0
        %661 = vmatpush.bf16.msra.mxu0 0
        %662 = vmatpush.bf16.msra.mxu0 0
        %663 = vmatpush.bf16.msra.mxu0 0
        %664 = vmatpush.bf16.msra.mxu0 %v595
        %665 = vmatpush.bf16.msra.mxu0 %v591
        %666 = vmatpush.bf16.msra.mxu0 %v587
        %667 = vmatpush.bf16.msra.mxu0 %v583
        %668 = vmatmul.bf16.gmra.mxu0 %v649
        %v669 = vpop.f32.mrf.mxu0
        %v670 = vadd.f32 %v610, %v669
        %v671 = vpop.f32.mrf.mxu0
        %v672 = vadd.f32 %v615, %v671
        %673 = vmatmul.bf16.gmra.mxu0 %v652
        %v674 = vpop.f32.mrf.mxu0
        %v675 = vadd.f32 %v620, %v674
        %v676 = vpop.f32.mrf.mxu0
        %v677 = vadd.f32 %v625, %v676
        %678 = vmatmul.bf16.gmra.mxu0 %v655
        %v679 = vpop.f32.mrf.mxu0
        %v680 = vadd.f32 %v630, %v679
        %v681 = vpop.f32.mrf.mxu0
        %v682 = vadd.f32 %v635, %v681
        %683 = vmatmul.bf16.gmra.mxu0 %v658
        %v684 = vpop.f32.mrf.mxu0
        %v685 = vadd.f32 %v640, %v684
        %v686 = vpop.f32.mrf.mxu0
        %v687 = vadd.f32 %v645, %v686
        %688 = vdwg.mxu0
        %689 = vmatpush.bf16.msra.mxu0 0
        %690 = vmatpush.bf16.msra.mxu0 0
        %691 = vmatpush.bf16.msra.mxu0 0
        %692 = vmatpush.bf16.msra.mxu0 0
        %693 = vmatpush.bf16.msra.mxu0 %v596
        %694 = vmatpush.bf16.msra.mxu0 %v592
        %695 = vmatpush.bf16.msra.mxu0 %v588
        %696 = vmatpush.bf16.msra.mxu0 %v584
        %697 = vmatmul.bf16.gmra.mxu0 %v649
        %v698 = vpop.f32.mrf.mxu0
        %v699 = vadd.f32 %v610, %v698
        %v700 = vpop.f32.mrf.mxu0
        %v701 = vadd.f32 %v615, %v700
        %702 = vmatmul.bf16.gmra.mxu0 %v652
        %v703 = vpop.f32.mrf.mxu0
        %v704 = vadd.f32 %v620, %v703
        %v705 = vpop.f32.mrf.mxu0
        %v706 = vadd.f32 %v625, %v705
        %707 = vmatmul.bf16.gmra.mxu0 %v655
        %v708 = vpop.f32.mrf.mxu0
        %v709 = vadd.f32 %v630, %v708
        %v710 = vpop.f32.mrf.mxu0
        %v711 = vadd.f32 %v635, %v710
        %712 = vmatmul.bf16.gmra.mxu0 %v658
        %v713 = vpop.f32.mrf.mxu0
        %v714 = vadd.f32 %v640, %v713
        %v715 = vpop.f32.mrf.mxu0
        %v716 = vadd.f32 %v645, %v715
        %717 = vdwg.mxu0
        %718 = vmatpush.bf16.msra.mxu0 0
        %719 = vmatpush.bf16.msra.mxu0 0
        %720 = vmatpush.bf16.msra.mxu0 0
        %721 = vmatpush.bf16.msra.mxu0 0
        %722 = vmatpush.bf16.msra.mxu0 %v597
        %723 = vmatpush.bf16.msra.mxu0 %v593
        %724 = vmatpush.bf16.msra.mxu0 %v589
        %725 = vmatpush.bf16.msra.mxu0 %v585
        %726 = vmatmul.bf16.gmra.mxu0 %v649
        %v727 = vpop.f32.mrf.mxu0
        %v728 = vadd.f32 %v610, %v727
        %v729 = vpop.f32.mrf.mxu0
        %v730 = vadd.f32 %v615, %v729
        %731 = vmatmul.bf16.gmra.mxu0 %v652
        %v732 = vpop.f32.mrf.mxu0
        %v733 = vadd.f32 %v620, %v732
        %v734 = vpop.f32.mrf.mxu0
        %v735 = vadd.f32 %v625, %v734
        %736 = vmatmul.bf16.gmra.mxu0 %v655
        %v737 = vpop.f32.mrf.mxu0
        %v738 = vadd.f32 %v630, %v737
        %v739 = vpop.f32.mrf.mxu0
        %v740 = vadd.f32 %v635, %v739
        %741 = vmatmul.bf16.gmra.mxu0 %v658
        %v742 = vpop.f32.mrf.mxu0
        %v743 = vadd.f32 %v640, %v742
        %v744 = vpop.f32.mrf.mxu0
        %v745 = vadd.f32 %v645, %v744
        %746 = vdwg.mxu0
        %747 = vmatpush.bf16.msra.mxu0 0
        %748 = vmatpush.bf16.msra.mxu0 0
        %749 = vmatpush.bf16.msra.mxu0 0
        %750 = vmatpush.bf16.msra.mxu0 0
        %751 = vmatpush.bf16.msra.mxu0 %v598
        %752 = vmatpush.bf16.msra.mxu0 %v594
        %753 = vmatpush.bf16.msra.mxu0 %v590
        %754 = vmatpush.bf16.msra.mxu0 %v586
        %755 = vmatmul.bf16.gmra.mxu0 %v649
        %v756 = vpop.f32.mrf.mxu0
        %v757 = vadd.f32 %v610, %v756
        %v758 = vpop.f32.mrf.mxu0
        %v759 = vadd.f32 %v615, %v758
        %760 = vmatmul.bf16.gmra.mxu0 %v652
        %v761 = vpop.f32.mrf.mxu0
        %v762 = vadd.f32 %v620, %v761
        %v763 = vpop.f32.mrf.mxu0
        %v764 = vadd.f32 %v625, %v763
        %765 = vmatmul.bf16.gmra.mxu0 %v655
        %v766 = vpop.f32.mrf.mxu0
        %v767 = vadd.f32 %v630, %v766
        %v768 = vpop.f32.mrf.mxu0
        %v769 = vadd.f32 %v635, %v768
        %770 = vmatmul.bf16.gmra.mxu0 %v658
        %v771 = vpop.f32.mrf.mxu0
        %v772 = vadd.f32 %v640, %v771
        %v773 = vpop.f32.mrf.mxu0
        %v774 = vadd.f32 %v645, %v773
        %775 = vdwg.mxu0
        %v776 = vmax.f32 %v670, 0.0
        %v777 = vmax.f32 %v699, 0.0
        %v778 = vmax.f32 %v728, 0.0
        %v779 = vmax.f32 %v757, 0.0
        %v780 = vmax.f32 %v672, 0.0
        %v781 = vmax.f32 %v701, 0.0
        %v782 = vmax.f32 %v730, 0.0
        %v783 = vmax.f32 %v759, 0.0
        %v784 = vmax.f32 %v675, 0.0
        %v785 = vmax.f32 %v704, 0.0
        %v786 = vmax.f32 %v733, 0.0
        %v787 = vmax.f32 %v762, 0.0
        %v788 = vmax.f32 %v677, 0.0
        %v789 = vmax.f32 %v706, 0.0
        %v790 = vmax.f32 %v735, 0.0
        %v791 = vmax.f32 %v764, 0.0
        %v792 = vmax.f32 %v680, 0.0
        %v793 = vmax.f32 %v709, 0.0
        %v794 = vmax.f32 %v738, 0.0
        %v795 = vmax.f32 %v767, 0.0
        %v796 = vmax.f32 %v682, 0.0
        %v797 = vmax.f32 %v711, 0.0
        %v798 = vmax.f32 %v740, 0.0
        %v799 = vmax.f32 %v769, 0.0
        %v800 = vmax.f32 %v685, 0.0
        %v801 = vmax.f32 %v714, 0.0
        %v802 = vmax.f32 %v743, 0.0
        %v803 = vmax.f32 %v772, 0.0
        %v804 = vmax.f32 %v687, 0.0
        %v805 = vmax.f32 %v716, 0.0
        %v806 = vmax.f32 %v745, 0.0
        %v807 = vmax.f32 %v774, 0.0
        %v808 = vld [vmem:[%s5] sm:$0xf]
        %v809 = vpack.c.bf16 %v808, %v808
        %v810 = vpack.c.bf16 %v780, %v776
        %v811 = vpack.c.bf16 %v781, %v777
        %v812 = vpack.c.bf16 %v782, %v778
        %v813 = vpack.c.bf16 %v783, %v779
        %v814 = vpack.c.bf16 %v788, %v784
        %v815 = vpack.c.bf16 %v789, %v785
        %v816 = vpack.c.bf16 %v790, %v786
        %v817 = vpack.c.bf16 %v791, %v787
        %v818 = vpack.c.bf16 %v796, %v792
        %v819 = vpack.c.bf16 %v797, %v793
        %v820 = vpack.c.bf16 %v798, %v794
        %v821 = vpack.c.bf16 %v799, %v795
        %v822 = vpack.c.bf16 %v804, %v800
        %v823 = vpack.c.bf16 %v805, %v801
        %v824 = vpack.c.bf16 %v806, %v802
        %v825 = vpack.c.bf16 %v807, %v803
        %v826 = vld [vmem:[%s6] sm:$0xf]
        %828 = vset.pattern.permute.xlu0 0
        %829 = vperm.xlu0 %828, %v826
        %v830 = vpop.permute.xlu0 %829
        %v833 = vsel %vm647, %v809, 0
        %835 = vmatpush.bf16.msra.mxu0 0
        %836 = vmatpush.bf16.msra.mxu0 0
        %837 = vmatpush.bf16.msra.mxu0 0
        %838 = vmatpush.bf16.msra.mxu0 0
        %839 = vmatpush.bf16.msra.mxu0 %v822
        %840 = vmatpush.bf16.msra.mxu0 %v818
        %841 = vmatpush.bf16.msra.mxu0 %v814
        %842 = vmatpush.bf16.msra.mxu0 %v810
        %843 = vmatmul.bf16.gmra.mxu0 %v833
        %v844 = vpop.f32.mrf.mxu0
        %v845 = vadd.f32 %v830, %v844
        %v846 = vpop.f32.mrf.mxu0
        %847 = vdwg.mxu0
        %848 = vmatpush.bf16.msra.mxu0 0
        %849 = vmatpush.bf16.msra.mxu0 0
        %850 = vmatpush.bf16.msra.mxu0 0
        %851 = vmatpush.bf16.msra.mxu0 0
        %852 = vmatpush.bf16.msra.mxu0 %v823
        %853 = vmatpush.bf16.msra.mxu0 %v819
        %854 = vmatpush.bf16.msra.mxu0 %v815
        %855 = vmatpush.bf16.msra.mxu0 %v811
        %856 = vmatmul.bf16.gmra.mxu0 %v833
        %v857 = vpop.f32.mrf.mxu0
        %v858 = vadd.f32 %v830, %v857
        %v859 = vpop.f32.mrf.mxu0
        %860 = vdwg.mxu0
        %861 = vmatpush.bf16.msra.mxu0 0
        %862 = vmatpush.bf16.msra.mxu0 0
        %863 = vmatpush.bf16.msra.mxu0 0
        %864 = vmatpush.bf16.msra.mxu0 0
        %865 = vmatpush.bf16.msra.mxu0 %v824
        %866 = vmatpush.bf16.msra.mxu0 %v820
        %867 = vmatpush.bf16.msra.mxu0 %v816
        %868 = vmatpush.bf16.msra.mxu0 %v812
        %869 = vmatmul.bf16.gmra.mxu0 %v833
        %v870 = vpop.f32.mrf.mxu0
        %v871 = vadd.f32 %v830, %v870
        %v872 = vpop.f32.mrf.mxu0
        %873 = vdwg.mxu0
        %874 = vmatpush.bf16.msra.mxu0 0
        %875 = vmatpush.bf16.msra.mxu0 0
        %876 = vmatpush.bf16.msra.mxu0 0
        %877 = vmatpush.bf16.msra.mxu0 0
        %878 = vmatpush.bf16.msra.mxu0 %v825
        %879 = vmatpush.bf16.msra.mxu0 %v821
        %880 = vmatpush.bf16.msra.mxu0 %v817
        %881 = vmatpush.bf16.msra.mxu0 %v813
        %882 = vmatmul.bf16.gmra.mxu0 %v833
        %v883 = vpop.f32.mrf.mxu0
        %v884 = vadd.f32 %v830, %v883
        %v885 = vpop.f32.mrf.mxu0
        %886 = vdwg.mxu0
        %v887 = vlaneseq
        %v888 = vshrl.u32 %v887, 7
        %vm889 = vcmp.eq.s32.totalorder %v888, 0
        %v890 = vxor.u32 %v845, 2147483648
        %v891 = vxor.u32 %v858, 2147483648
        %v892 = vxor.u32 %v871, 2147483648
        %v893 = vxor.u32 %v884, 2147483648
        %v894 = vmul.f32 %v890, 1.442695
        %v895 = vpow.pop %v894
        %v896 = vmul.f32 %v891, 1.442695
        %v897 = vpow.pop %v896
        %v898 = vmul.f32 %v892, 1.442695
        %v899 = vpow.pop %v898
        %v900 = vmul.f32 %v893, 1.442695
        %v901 = vpow.pop %v900
        %v902 = vadd.f32 %v895, 1.0
        %v903 = vadd.f32 %v897, 1.0
        %v904 = vadd.f32 %v899, 1.0
        %v905 = vadd.f32 %v901, 1.0
        %v906 = vrcp.pop %v902
        %v907 = vmul.f32 %v902, %v906
        %v908 = vsub.f32 1.0, %v907
        %v909 = vmul.f32 %v906, %v908
        %v910 = vadd.f32 %v906, %v909
        %vm911 = vweird.f32 %v902
        %vm912 = vweird.f32 %v906
        %vm913 = vmor %vm911, %vm912
        %v914 = vsel %vm913, %v906, %v910
        %v915 = vand.u32 2147483647, %v902
        %vm916 = vcmp.eq.f32.partialorder %v915, 8.507059e+37
        %v917 = vand.u32 %v902, 2147483648
        %v918 = vor.u32 1.1754944e-38, %v917
        %v919 = vsel %vm916, %v918, %v914
        %v920 = vmul.f32 1.0, %v919
        %v921 = vrcp.pop %v903
        %v922 = vmul.f32 %v903, %v921
        %v923 = vsub.f32 1.0, %v922
        %v924 = vmul.f32 %v921, %v923
        %v925 = vadd.f32 %v921, %v924
        %vm926 = vweird.f32 %v903
        %vm927 = vweird.f32 %v921
        %vm928 = vmor %vm926, %vm927
        %v929 = vsel %vm928, %v921, %v925
        %v930 = vand.u32 2147483647, %v903
        %vm931 = vcmp.eq.f32.partialorder %v930, 8.507059e+37
        %v932 = vand.u32 %v903, 2147483648
        %v933 = vor.u32 1.1754944e-38, %v932
        %v934 = vsel %vm931, %v933, %v929
        %v935 = vmul.f32 1.0, %v934
        %v936 = vrcp.pop %v904
        %v937 = vmul.f32 %v904, %v936
        %v938 = vsub.f32 1.0, %v937
        %v939 = vmul.f32 %v936, %v938
        %v940 = vadd.f32 %v936, %v939
        %vm941 = vweird.f32 %v904
        %vm942 = vweird.f32 %v936
        %vm943 = vmor %vm941, %vm942
        %v944 = vsel %vm943, %v936, %v940
        %v945 = vand.u32 2147483647, %v904
        %vm946 = vcmp.eq.f32.partialorder %v945, 8.507059e+37
        %v947 = vand.u32 %v904, 2147483648
        %v948 = vor.u32 1.1754944e-38, %v947
        %v949 = vsel %vm946, %v948, %v944
        %v950 = vmul.f32 1.0, %v949
        %v951 = vrcp.pop %v905
        %v952 = vmul.f32 %v905, %v951
        %v953 = vsub.f32 1.0, %v952
        %v954 = vmul.f32 %v951, %v953
        %v955 = vadd.f32 %v951, %v954
        %vm956 = vweird.f32 %v905
        %vm957 = vweird.f32 %v951
        %vm958 = vmor %vm956, %vm957
        %v959 = vsel %vm958, %v951, %v955
        %v960 = vand.u32 2147483647, %v905
        %vm961 = vcmp.eq.f32.partialorder %v960, 8.507059e+37
        %v962 = vand.u32 %v905, 2147483648
        %v963 = vor.u32 1.1754944e-38, %v962
        %v964 = vsel %vm961, %v963, %v959
        %v965 = vmul.f32 1.0, %v964
        %v966 = vsel %vm889, %v845, %v920
        %v967 = vsel %vm889, %v858, %v935
        %v968 = vsel %vm889, %v871, %v950
        %v969 = vsel %vm889, %v884, %v965
        %v974 = vrot.slane %v967, 4
        %v975 = vrot.slane %v969, 4
        %v976 = vsel %vm410, %v966, %v974
        %v977 = vsel %vm410, %v968, %v975
        %980 = vst [vmem:[%s311] sm:$0xff] %v976
        %981 = vst [vmem:[%s311 + $0x8] sm:$0xff] %v977
        %s982 = sand.u32 %s202, 1
        %s983 = scalar_lea.sflag [#allocation3], %s982
        %s984 = sand.u32 %s202, 1
        %s985 = smul.addr %s984, 16
        %s986 = scalar_lea.vmem [#allocation2], %s985
        // Predicated region
        $region49: #{tpu_custom_call.1} parent=47 // pred_check
          %p987 = pneg %p212
        $region50: #{tpu_custom_call.1} parent=47 // pred_check_branch
          %989 = sbr.rel (%p987) target = $region52
        $region51: #{tpu_custom_call.1} parent=47 // pred_region
          %s990 = smul.u32 4, %s26
          %992 = vsyncadd %s983, 0
          %s993 = smul.addr %s25, 4
          %s994 = sadd.s32 %s990, %s993
          %s995 = smul.addr %s994, 4
          %s996 = scalar_lea.hbm %s7, %s995
          %s998 = sshll.u32 %s986, 4
          %s999 = int_to_ptr.vmem [resolvable:$true] %s998
          %s1000 = sshll.u32 %s996, 4
          %s1001 = int_to_ptr.hbm [resolvable:$true] %s1000
          %1003 = dma.vmem_to_hbm [thread:$0]  %s999, 256, %s1001, %s983
        $region52: #{tpu_custom_call.1} parent=47 // pred_fallthru
          _
      $region48: #{tpu_custom_call.1} parent=5 // pred_fallthru
        _
      %p1004 = scmp.le.s32.totalorder 2, %s16
      // Predicated region
      $region53: #{tpu_custom_call.1} parent=5 // pred_check
        %p1005 = pneg %p1004
      $region54: #{tpu_custom_call.1} parent=5 // pred_check_branch
        %1007 = sbr.rel (%p1005) target = $region56
      $region55: #{tpu_custom_call.1} parent=5 // pred_region
        %s1008 = ssub.s32 %s16, 2
        // Predicated region
        $region57: #{tpu_custom_call.1} parent=55 // pred_check
          %p1009 = pneg %p218
        $region58: #{tpu_custom_call.1} parent=55 // pred_check_branch
          %1011 = sbr.rel (%p1009) target = $region60
        $region59: #{tpu_custom_call.1} parent=55 // pred_region
          %s1012 = sand.u32 %s203, 1
          %s1013 = scalar_lea.sflag [#allocation3], %s1012
          %s1014 = sand.u32 %s203, 1
          %s1015 = smul.addr %s1014, 16
          %s1016 = scalar_lea.vmem [#allocation2], %s1015
          %1018 = dma.done %s1013, 256
        $region60: #{tpu_custom_call.1} parent=55 // pred_fallthru
          _
      $region56: #{tpu_custom_call.1} parent=5 // pred_fallthru
        _
    $region6: #{tpu_custom_call.1} parent=1 // loop_footer
      %s20 = sadd.s32 1, %s16
    $region7: #{tpu_custom_call.1} parent=1 // loop_footer_branch
      %15 = sbr.rel target = $region3
    $region8: #{tpu_custom_call.1} parent=1 // loop_exit
      _
    %1019 = vsyncpa [#allocation3], 1
    %s1020 = scalar_lea.sflag [#allocation3], 1
    %1021 = vsyncpa %s1020, 1

</llo_original>
